<compile_context>
chip_gen: v5e
topology: v5e:2x2
jax: 0.10.0
libtpu: 0.0.40
codegen_flags: <defaults>
</compile_context>

<pallas_src>
import jax
import jax.numpy as jnp
from jax.experimental import pallas as pl
from jax.experimental.pallas import tpu as pltpu

# ---- small, deterministic problem sizes (consistent with the module) ----
N = 8                    # number of nodes (batch)
D = 8                    # args.hidden_dims  (SPD matrix size)
F = D * (D + 1) // 2     # upper-triangular feature count = 36
C = 4                    # args.num_classes
C_PAD = 128              # lane-dense padded class axis (unmasked output stores)
EIG_EPS = 1e-12          # clamp before log (review correctness concern)


def _round_up(x, m):
    return ((x + m - 1) // m) * m


# ---------------------------------------------------------------------------
# Pallas kernel: fused SPD-logmap reconstruction + flatten + class projection
# ---------------------------------------------------------------------------
def _fused_logmap_proj_kernel(eval_ref, evec_ref, w_ref, b_ref, o_ref):
    # eval_ref: (tn, D) f32 eigenvalues    evec_ref: (tn, D, D) f32 eigenvectors
    # w_ref:    (D*D, C_PAD) bf16 folded weight   b_ref: (1, C_PAD) f32 bias
    d = eval_ref.shape[-1]

    # log of eigenvalues, clamped for numerical safety (EUP slot, ~free).
    log_lam = jnp.log(jnp.maximum(eval_ref[...], EIG_EPS))           # (tn, D)

    # SPD logmap_id: V @ diag(log_lam) @ V^T, batched over nodes.
    v = evec_ref[...]                                                # (tn, D, D)
    scaled = v * log_lam[:, None, :]                                 # (tn, D, D)
    logm = jnp.einsum('nik,njk->nij', scaled, v,
                      preferred_element_type=jnp.float32)            # (tn, D, D)

    # Row-major flatten without an in-kernel reshape relayout: concatenate the
    # D sublane slices along lanes -> column order i*D + j (matches W_full).
    feats = jnp.concatenate([logm[:, i, :] for i in range(d)], axis=-1)  # (tn, D*D)

    # bf16 operands on the MXU (f32 accumulate); triu gather already folded
    # into the zero-scattered weight, dropout(eval) = identity.
    acc = jnp.dot(feats.astype(jnp.bfloat16), w_ref[...],
                  preferred_element_type=jnp.float32)                # (tn, C_PAD)
    o_ref[...] = (acc + b_ref[...]).astype(o_ref.dtype)


def _pick_batch_tile(n_pad, tn_max=1024):
    # One fat tile amortizes per-grid-step overhead (~0.35 us).  For larger
    # batches, split into >=2 "parallel" steps so v7x's two TensorCores both
    # get work (neutral on single-core v5e/v6e).
    if n_pad <= 8 or n_pad > 2 * tn_max:
        return min(n_pad, tn_max)
    half = -(-n_pad // 2)            # cdiv(n_pad, 2)
    half = _round_up(half, 8)        # keep sublane alignment
    return min(half, tn_max)


def fused_logmap_classify(evals, evecs, w_full, b_full, *, tn_max=1024):
    """evals: [n, D] f32, evecs: [n, D, D] f32, w_full: [D*D, C_PAD] bf16,
    b_full: [1, C_PAD] f32  ->  [n, C_PAD] f32 logits (padded class axis)."""
    n, d = evals.shape
    k = d * d
    c_pad = w_full.shape[-1]

    tn = _pick_batch_tile(n, tn_max)
    num_tiles = pl.cdiv(n, tn)
    grid = (num_tiles,)

    # Constant weight / bias: resident across all batch tiles.  When the grid
    # has >1 step, single-buffer them (no second VMEM copy / DMA bookkeeping).
    if num_tiles > 1:
        w_spec = pl.BlockSpec((k, c_pad), lambda i: (0, 0),
                              pipeline_mode=pl.Buffered(1))
        b_spec = pl.BlockSpec((1, c_pad), lambda i: (0, 0),
                              pipeline_mode=pl.Buffered(1))
    else:
        w_spec = pl.BlockSpec((k, c_pad), lambda i: (0, 0))
        b_spec = pl.BlockSpec((1, c_pad), lambda i: (0, 0))

    return pl.pallas_call(
        _fused_logmap_proj_kernel,
        out_shape=jax.ShapeDtypeStruct((n, c_pad), jnp.float32),
        grid_spec=pltpu.PrefetchScalarGridSpec(
            num_scalar_prefetch=0,
            grid=grid,
            in_specs=[
                pl.BlockSpec((tn, d), lambda i: (i, 0)),        # eigenvalues tile
                pl.BlockSpec((tn, d, d), lambda i: (i, 0, 0)),  # eigenvectors tile
                w_spec,                                         # folded weight (resident)
                b_spec,                                         # bias row (resident)
            ],
            out_specs=pl.BlockSpec((tn, c_pad), lambda i: (i, 0)),
        ),
        # "parallel" lets v7x shard batch tiles across its 2 TensorCores.
        compiler_params=pltpu.CompilerParams(
            dimension_semantics=("parallel",)),
        # Advisory cost so XLA schedules this micro-kernel sensibly around eigh.
        cost_estimate=pl.CostEstimate(
            flops=2 * n * d * d * d + 2 * n * k * c_pad,
            transcendentals=n * d,
            bytes_accessed=(4 * n * d + 4 * n * k + 2 * k * c_pad
                            + 4 * c_pad + 4 * n * c_pad)),
    )(evals, evecs, w_full, b_full)


# ---------------------------------------------------------------------------
# Glue (plain JAX): eigh + folded/padded parameters + batch padding
# ---------------------------------------------------------------------------
def build_projection_params(proj_w, proj_b, rows, cols, d, c_pad=C_PAD):
    """Fold the upper-triangular gather into the weight matrix and pad the
    class axis to a lane-dense width.  proj_w: [F, C], proj_b: [1, C]."""
    f, c = proj_w.shape
    flat_idx = rows * d + cols                       # triu position -> flat index in [0, d*d)
    w_full = jnp.zeros((d * d, c_pad), jnp.float32)
    w_full = w_full.at[flat_idx, :c].set(proj_w.astype(jnp.float32))
    b_full = jnp.zeros((1, c_pad), jnp.float32)
    b_full = b_full.at[0, :c].set(proj_b.reshape(-1).astype(jnp.float32))
    # bf16 weight: native MXU rate + half the DMA bytes; accumulate stays f32.
    return w_full.astype(jnp.bfloat16), b_full


def classifier_forward(node_feats, w_full, b_full, num_classes):
    # TODO(synk): symmetric eigendecomposition has no clean Pallas equivalent;
    #             computed with jnp.linalg.eigh in XLA.  Everything downstream
    #             (log, reconstruct, flatten, projection) is fused in-kernel.
    evals, evecs = jnp.linalg.eigh(node_feats)                 # [n, D], [n, D, D]
    n = evals.shape[0]
    n_pad = _round_up(n, 8)                                    # sublane-aligned batch
    if n_pad != n:
        evals = jnp.pad(evals, ((0, n_pad - n), (0, 0)), constant_values=1.0)  # log(1)=0
        evecs = jnp.pad(evecs, ((0, n_pad - n), (0, 0), (0, 0)))
    logits_pad = fused_logmap_classify(evals, evecs, w_full, b_full)
    # NOTE: for very large n the 128-wide padded writeback could be packed
    # (32 nodes x C=4 per 128-lane row) to cut HBM bytes; irrelevant at n=8.
    return logits_pad[:n, :num_classes]                        # [n, C]


if __name__ == "__main__":
    key = jax.random.PRNGKey(0)
    k_x, k_w, k_b = jax.random.split(key, 3)

    # deterministic SPD input batch: X = A A^T + D * I
    a = jax.random.normal(k_x, (N, D, D), dtype=jnp.float32)
    node_feats = a @ jnp.swapaxes(a, -1, -2) + D * jnp.eye(D, dtype=jnp.float32)

    # deterministic Linear(F, C) parameters (synthetic init, not a checkpoint)
    proj_w = jax.random.normal(k_w, (F, C), dtype=jnp.float32) / jnp.sqrt(F)
    proj_b = jax.random.normal(k_b, (1, C), dtype=jnp.float32) * 0.01

    rows, cols = jnp.triu_indices(D)   # row-major order, same as torch.triu_indices(D, D)
    w_full, b_full = build_projection_params(proj_w, proj_b, rows, cols, D)

    out = classifier_forward(node_feats, w_full, b_full, C)
    out = jax.block_until_ready(out)

    # reference check in plain JAX (original logmap -> triu gather -> linear), full f32
    w_ref, v_ref = jnp.linalg.eigh(node_feats)
    log_mats_ref = (v_ref * jnp.log(w_ref)[..., None, :]) @ jnp.swapaxes(v_ref, -1, -2)
    ref = log_mats_ref[:, rows, cols] @ proj_w + proj_b
    assert out.shape == (N, C)
    # tolerance relaxed vs 1e-4 because the projection matmul uses bf16 operands
    # (f32 accumulate), as recommended by the perf review.
    assert jnp.allclose(out, ref, atol=5e-2, rtol=5e-2), "mismatch vs reference"

    print("KERNEL_OK")
</pallas_src>

<mosaic_0001>
module attributes {stable_mosaic.version = 11 : i64} {
  func.func @_fused_logmap_proj_kernel(%arg0: i32, %arg1: memref<8x8xf32, #tpu.memory_space<vmem>>, %arg2: memref<8x8x8xf32, #tpu.memory_space<vmem>>, %arg3: memref<64x128xbf16, #tpu.memory_space<vmem>>, %arg4: memref<1x128xf32, #tpu.memory_space<vmem>>, %arg5: memref<8x128xf32, #tpu.memory_space<vmem>>) attributes {dimension_semantics = [#tpu.dimension_semantics<parallel>], iteration_bounds = array<i64: 1>, scalar_prefetch = 0 : i64, scratch_operands = 0 : i64, tpu.core_type = #tpu.core_type<tc>, window_params = [{transform_indices = @transform_0, window_bounds = array<i64: 8, 8>}, {transform_indices = @transform_1, window_bounds = array<i64: 8, 8, 8>}, {pipeline_mode = #tpu.pipeline_mode<synchronous>, transform_indices = @transform_2, window_bounds = array<i64: 64, 128>}, {pipeline_mode = #tpu.pipeline_mode<synchronous>, transform_indices = @transform_3, window_bounds = array<i64: 1, 128>}, {transform_indices = @transform_4, window_bounds = array<i64: 8, 128>}]} {
    %c0 = arith.constant 0 : index
    %c0_0 = arith.constant 0 : index
    %0 = vector.load %arg1[%c0, %c0_0] : memref<8x8xf32, #tpu.memory_space<vmem>>, vector<8x8xf32>
    %cst = arith.constant 9.99999996E-13 : f32
    %1 = vector.broadcast %cst : f32 to vector<8x8xf32>
    %2 = arith.maximumf %0, %1 : vector<8x8xf32>
    %3 = math.log %2 : vector<8x8xf32>
    %c0_1 = arith.constant 0 : index
    %c0_2 = arith.constant 0 : index
    %c0_3 = arith.constant 0 : index
    %4 = vector.load %arg2[%c0_1, %c0_2, %c0_3] : memref<8x8x8xf32, #tpu.memory_space<vmem>>, vector<8x8x8xf32>
    %5 = vector.shape_cast %3 : vector<8x8xf32> to vector<8x1x8xf32>
    %6 = vector.broadcast %5 : vector<8x1x8xf32> to vector<8x8x8xf32>
    %7 = arith.mulf %4, %6 : vector<8x8x8xf32>
    "tpu.trace_start"() <{level = 10 : i32, message = "nik,njk->nij"}> : () -> ()
    %cst_4 = arith.constant dense<0.000000e+00> : vector<8x8x8xf32>
    %8 = tpu.matmul %7, %4, %cst_4 {dimension_numbers = #tpu.dot_dimension_numbers<[2], [2], [1], [1], [0, 0, 0, 1, 1, 1], [0], [0]>} : vector<8x8x8xf32>, vector<8x8x8xf32>, vector<8x8x8xf32> -> vector<8x8x8xf32>
    "tpu.trace_stop"() : () -> ()
    %9 = vector.extract_strided_slice %8 {offsets = [0, 0, 0], sizes = [8, 1, 8], strides = [1, 1, 1]} : vector<8x8x8xf32> to vector<8x1x8xf32>
    %10 = vector.shape_cast %9 : vector<8x1x8xf32> to vector<8x8xf32>
    %11 = vector.extract_strided_slice %8 {offsets = [0, 1, 0], sizes = [8, 1, 8], strides = [1, 1, 1]} : vector<8x8x8xf32> to vector<8x1x8xf32>
    %12 = vector.shape_cast %11 : vector<8x1x8xf32> to vector<8x8xf32>
    %13 = vector.extract_strided_slice %8 {offsets = [0, 2, 0], sizes = [8, 1, 8], strides = [1, 1, 1]} : vector<8x8x8xf32> to vector<8x1x8xf32>
    %14 = vector.shape_cast %13 : vector<8x1x8xf32> to vector<8x8xf32>
    %15 = vector.extract_strided_slice %8 {offsets = [0, 3, 0], sizes = [8, 1, 8], strides = [1, 1, 1]} : vector<8x8x8xf32> to vector<8x1x8xf32>
    %16 = vector.shape_cast %15 : vector<8x1x8xf32> to vector<8x8xf32>
    %17 = vector.extract_strided_slice %8 {offsets = [0, 4, 0], sizes = [8, 1, 8], strides = [1, 1, 1]} : vector<8x8x8xf32> to vector<8x1x8xf32>
    %18 = vector.shape_cast %17 : vector<8x1x8xf32> to vector<8x8xf32>
    %19 = vector.extract_strided_slice %8 {offsets = [0, 5, 0], sizes = [8, 1, 8], strides = [1, 1, 1]} : vector<8x8x8xf32> to vector<8x1x8xf32>
    %20 = vector.shape_cast %19 : vector<8x1x8xf32> to vector<8x8xf32>
    %21 = vector.extract_strided_slice %8 {offsets = [0, 6, 0], sizes = [8, 1, 8], strides = [1, 1, 1]} : vector<8x8x8xf32> to vector<8x1x8xf32>
    %22 = vector.shape_cast %21 : vector<8x1x8xf32> to vector<8x8xf32>
    %23 = vector.extract_strided_slice %8 {offsets = [0, 7, 0], sizes = [8, 1, 8], strides = [1, 1, 1]} : vector<8x8x8xf32> to vector<8x1x8xf32>
    %24 = vector.shape_cast %23 : vector<8x1x8xf32> to vector<8x8xf32>
    %25 = tpu.concatenate %10, %12, %14, %16, %18, %20, %22, %24 in 1 : vector<8x8xf32>, vector<8x8xf32>, vector<8x8xf32>, vector<8x8xf32>, vector<8x8xf32>, vector<8x8xf32>, vector<8x8xf32>, vector<8x8xf32> -> vector<8x64xf32>
    %26 = arith.truncf %25 : vector<8x64xf32> to vector<8x64xbf16>
    %c0_5 = arith.constant 0 : index
    %c0_6 = arith.constant 0 : index
    %27 = vector.load %arg3[%c0_5, %c0_6] : memref<64x128xbf16, #tpu.memory_space<vmem>>, vector<64x128xbf16>
    %cst_7 = arith.constant dense<0.000000e+00> : vector<8x128xf32>
    %28 = tpu.matmul %26, %27, %cst_7 {dimension_numbers = #tpu.dot_dimension_numbers<[1], [0], [0], [1], [0, 0, 1, 1], [], []>} : vector<8x64xbf16>, vector<64x128xbf16>, vector<8x128xf32> -> vector<8x128xf32>
    %c0_8 = arith.constant 0 : index
    %c0_9 = arith.constant 0 : index
    %29 = vector.load %arg4[%c0_8, %c0_9] : memref<1x128xf32, #tpu.memory_space<vmem>>, vector<1x128xf32>
    %30 = vector.broadcast %29 : vector<1x128xf32> to vector<8x128xf32>
    %31 = arith.addf %28, %30 : vector<8x128xf32>
    %c0_10 = arith.constant 0 : index
    %c0_11 = arith.constant 0 : index
    %32 = vector.load %arg5[%c0_10, %c0_11] : memref<8x128xf32, #tpu.memory_space<vmem>>, vector<8x128xf32>
    tpu.vector_store %arg5[%c0_10, %c0_11], %31 {strides = array<i32>} : memref<8x128xf32, #tpu.memory_space<vmem>>, vector<8x128xf32>,
    return
  }
  func.func @transform_0(%arg0: i32) -> (i32, i32) {
    %c0_i32 = arith.constant 0 : i32
    %c0_i32_0 = arith.constant 0 : i32
    return %arg0, %c0_i32 : i32, i32
  }
  func.func @transform_1(%arg0: i32) -> (i32, i32, i32) {
    %c0_i32 = arith.constant 0 : i32
    %c0_i32_0 = arith.constant 0 : i32
    %c0_i32_1 = arith.constant 0 : i32
    return %arg0, %c0_i32, %c0_i32_0 : i32, i32, i32
  }
  func.func @transform_2(%arg0: i32) -> (i32, i32) {
    %c0_i32 = arith.constant 0 : i32
    %c0_i32_0 = arith.constant 0 : i32
    %c0_i32_1 = arith.constant 0 : i32
    return %c0_i32, %c0_i32_0 : i32, i32
  }
  func.func @transform_3(%arg0: i32) -> (i32, i32) {
    %c0_i32 = arith.constant 0 : i32
    %c0_i32_0 = arith.constant 0 : i32
    %c0_i32_1 = arith.constant 0 : i32
    return %c0_i32, %c0_i32_0 : i32, i32
  }
  func.func @transform_4(%arg0: i32) -> (i32, i32) {
    %c0_i32 = arith.constant 0 : i32
    %c0_i32_0 = arith.constant 0 : i32
    return %arg0, %c0_i32 : i32, i32
  }
}

</mosaic_0001>

<llo_original>
// kernel: tpu_custom_call.1
$region0: #{tpu_custom_call.1}
  #allocation0 [shape = 'u32[]', space=smem, size = 0x4, offset = 0x4, fixed_abs, tag = 'smem constant byte address 0x4 - core index']
  #allocation1 [shape = 'u32[72,128]{1,0:T(1,128)}', space=vmem, size = 0x9000, scoped, tag = 'internal scratch']
  %s0 = inlined_call_operand.hbm [shape: f32[8,8], index: 0, kind: input, shape index: {}]
  %s1 = inlined_call_operand.hbm [shape: f32[8,8,8], index: 1, kind: input, shape index: {}]
  %s2 = inlined_call_operand.hbm [shape: bf16[64,128], index: 2, kind: input, shape index: {}]
  %s3 = inlined_call_operand.vmem [shape: f32[1,128], index: 3, kind: input, shape index: {}]
  %s4 = inlined_call_operand.hbm [shape: f32[8,128], index: 4, kind: output, shape index: {}]
  %s5 = sld [smem:[#allocation0]]
  $region38: #{tpu_custom_call.1} parent=0
    _
  %s7 = ssub.s32 1, %s5
  %s8 = scalar_select 0, %s7, %s5
  $region1: #{tpu_custom_call.1} parent=0
    #allocation2 [shape = 'u8[4096]{0}', space=vmem, size = 0x1000, scoped, tag = 'input window, operand 0, single buffered']
    #allocation3 [shape = 's32[1]{0}', space=sflag, size = 0x4, scoped, tag = 'scoped memory for tpu_custom_call.1']
    #allocation4 [shape = 's32[1]{0}', space=sflag, size = 0x4, scoped, tag = 'scoped memory for tpu_custom_call.1']
    #allocation5 [shape = 'u8[32768]{0}', space=vmem, size = 0x8000, scoped, tag = 'input window, operand 1, single buffered']
    #allocation6 [shape = 's32[1]{0}', space=sflag, size = 0x4, scoped, tag = 'scoped memory for tpu_custom_call.1']
    #allocation7 [shape = 'u8[16384]{0}', space=vmem, size = 0x4000, scoped, tag = 'input window, operand 2, single buffered']
    #allocation8 [shape = 'u8[4096]{0}', space=vmem, size = 0x1000, scoped, tag = 'output window, operand 0, single buffered']
    %9 = vsyncpa [#allocation3], 0
    %10 = vsyncpa [#allocation6], 0
    %11 = vsyncpa [#allocation4], 0
    // Predicated region
    $region2: #{tpu_custom_call.1} parent=1 // pred_check
      _
    $region3: #{tpu_custom_call.1} parent=1 // pred_check_branch
      %13 = sbr.rel (0) target = $region5
    $region4: #{tpu_custom_call.1} parent=1 // pred_region
      %15 = vsyncadd [#allocation3], 0
      %s17 = sshll.u32 %s0, 4
      %s18 = int_to_ptr.hbm [resolvable:$true] %s17
      %s19 = sshll.u32 [#allocation2], 4
      %s20 = int_to_ptr.vmem [resolvable:$true] %s19
      %22 = dma.hbm_to_vmem [thread:$0]  %s18, 128, %s20, [#allocation3]
    $region5: #{tpu_custom_call.1} parent=1 // pred_fallthru
      _
    // Predicated region
    $region6: #{tpu_custom_call.1} parent=1 // pred_check
      _
    $region7: #{tpu_custom_call.1} parent=1 // pred_check_branch
      %24 = sbr.rel (0) target = $region9
    $region8: #{tpu_custom_call.1} parent=1 // pred_region
      %26 = vsyncadd [#allocation6], 0
      %s27 = sshll.u32 %s1, 4
      %s28 = int_to_ptr.hbm [resolvable:$true] %s27
      %s29 = sshll.u32 [#allocation5], 4
      %s30 = int_to_ptr.vmem [resolvable:$true] %s29
      %35 = dma.hbm_to_vmem [thread:$0]  %s28, 1024, %s30, [#allocation6], 128, 128, 8
    $region9: #{tpu_custom_call.1} parent=1 // pred_fallthru
      _
    // Predicated region
    $region10: #{tpu_custom_call.1} parent=1 // pred_check
      _
    $region11: #{tpu_custom_call.1} parent=1 // pred_check_branch
      %37 = sbr.rel (0) target = $region13
    $region12: #{tpu_custom_call.1} parent=1 // pred_region
      %39 = vsyncadd [#allocation6], 0
      %s40 = sshll.u32 %s2, 4
      %s41 = int_to_ptr.hbm [resolvable:$true] %s40
      %s42 = sshll.u32 [#allocation7], 4
      %s43 = int_to_ptr.vmem [resolvable:$true] %s42
      %48 = dma.hbm_to_vmem [thread:$0]  %s41, 512, %s43, [#allocation6], 64, 64, 4
    $region13: #{tpu_custom_call.1} parent=1 // pred_fallthru
      _
    // Predicated region
    $region14: #{tpu_custom_call.1} parent=1 // pred_check
      _
    $region15: #{tpu_custom_call.1} parent=1 // pred_check_branch
      %50 = sbr.rel (0) target = $region17
    $region16: #{tpu_custom_call.1} parent=1 // pred_region
      _
    $region17: #{tpu_custom_call.1} parent=1 // pred_fallthru
      _
    // Predicated region
    $region18: #{tpu_custom_call.1} parent=1 // pred_check
      _
    $region19: #{tpu_custom_call.1} parent=1 // pred_check_branch
      %52 = sbr.rel (0) target = $region21
    $region20: #{tpu_custom_call.1} parent=1 // pred_region
      %54 = dma.done [#allocation3], 128
    $region21: #{tpu_custom_call.1} parent=1 // pred_fallthru
      _
    // Predicated region
    $region22: #{tpu_custom_call.1} parent=1 // pred_check
      _
    $region23: #{tpu_custom_call.1} parent=1 // pred_check_branch
      %56 = sbr.rel (0) target = $region25
    $region24: #{tpu_custom_call.1} parent=1 // pred_region
      %58 = dma.done [#allocation6], 1024
    $region25: #{tpu_custom_call.1} parent=1 // pred_fallthru
      _
    // Predicated region
    $region26: #{tpu_custom_call.1} parent=1 // pred_check
      _
    $region27: #{tpu_custom_call.1} parent=1 // pred_check_branch
      %60 = sbr.rel (0) target = $region29
    $region28: #{tpu_custom_call.1} parent=1 // pred_region
      %62 = dma.done [#allocation6], 512
    $region29: #{tpu_custom_call.1} parent=1 // pred_fallthru
      _
    %v64 = vld [vmem:[#allocation2] sm:$0xff]
    %v65 = vmax.f32 %v64, 1e-12
    %v66 = vlog2.pop %v65
    %v67 = vmul.f32 %v66, 0.6931472
    %v68 = vld [vmem:[#allocation5] sm:$0xff]
    %v69 = vld [vmem:[#allocation5 + $0x8] sm:$0xff]
    %v70 = vld [vmem:[#allocation5 + $0x10] sm:$0xff]
    %v71 = vld [vmem:[#allocation5 + $0x18] sm:$0xff]
    %v72 = vld [vmem:[#allocation5 + $0x20] sm:$0xff]
    %v73 = vld [vmem:[#allocation5 + $0x28] sm:$0xff]
    %v74 = vld [vmem:[#allocation5 + $0x30] sm:$0xff]
    %v75 = vld [vmem:[#allocation5 + $0x38] sm:$0xff]
    %v77 = vrot.slane %v67, 1
    %v78 = vrot.slane %v67, 2
    %v79 = vrot.slane %v67, 3
    %v80 = vrot.slane %v67, 4
    %v81 = vrot.slane %v67, 5
    %v82 = vrot.slane %v67, 6
    %v83 = vrot.slane %v67, 7
    %v84 = vperm.slane %v67, 0
    %v85 = vperm.slane %v77, 0
    %v86 = vperm.slane %v78, 0
    %v87 = vperm.slane %v79, 0
    %v88 = vperm.slane %v80, 0
    %v89 = vperm.slane %v81, 0
    %v90 = vperm.slane %v82, 0
    %v91 = vperm.slane %v83, 0
    %v100 = vmul.f32 %v68, %v84
    %v101 = vmul.f32 %v69, %v85
    %v102 = vmul.f32 %v70, %v86
    %v103 = vmul.f32 %v71, %v87
    %v104 = vmul.f32 %v72, %v88
    %v105 = vmul.f32 %v73, %v89
    %v106 = vmul.f32 %v74, %v90
    %v107 = vmul.f32 %v75, %v91
    %vm108 = vcmask 64512
    %v110 = vsel %vm108, %v100, 0
    %v113 = vsel %vm108, %v68, 0
    %115 = vmatpush.xpose.msra.mxu0 0.0
    %116 = vmatpush.xpose.msra.mxu0 0.0
    %117 = vmatpush.xpose.msra.mxu0 0.0
    %118 = vmatpush.xpose.msra.mxu0 0.0
    %119 = vmatpush.xpose.msra.mxu0 0.0
    %120 = vmatpush.xpose.msra.mxu0 0.0
    %121 = vmatpush.xpose.msra.mxu0 0.0
    %122 = vmatpush.xpose.msra.mxu0 0.0
    %123 = vmatpush.xpose.msra.mxu0 0.0
    %124 = vmatpush.xpose.msra.mxu0 0.0
    %125 = vmatpush.xpose.msra.mxu0 0.0
    %126 = vmatpush.xpose.msra.mxu0 0.0
    %127 = vmatpush.xpose.msra.mxu0 0.0
    %128 = vmatpush.xpose.msra.mxu0 0.0
    %129 = vmatpush.xpose.msra.mxu0 0.0
    %130 = vmatpush.xpose.msra.mxu0 %v113
    %131 = vmatmul.f32.gmra.mxu0 %v110
    %v132 = vpop.f32.mrf.mxu0
    %v133 = vadd.f32 0.0, %v132
    %134 = vdwg.mxu0
    %v136 = vsel %vm108, %v101, 0
    %v139 = vsel %vm108, %v69, 0
    %141 = vmatpush.xpose.msra.mxu0 0.0
    %142 = vmatpush.xpose.msra.mxu0 0.0
    %143 = vmatpush.xpose.msra.mxu0 0.0
    %144 = vmatpush.xpose.msra.mxu0 0.0
    %145 = vmatpush.xpose.msra.mxu0 0.0
    %146 = vmatpush.xpose.msra.mxu0 0.0
    %147 = vmatpush.xpose.msra.mxu0 0.0
    %148 = vmatpush.xpose.msra.mxu0 0.0
    %149 = vmatpush.xpose.msra.mxu0 0.0
    %150 = vmatpush.xpose.msra.mxu0 0.0
    %151 = vmatpush.xpose.msra.mxu0 0.0
    %152 = vmatpush.xpose.msra.mxu0 0.0
    %153 = vmatpush.xpose.msra.mxu0 0.0
    %154 = vmatpush.xpose.msra.mxu0 0.0
    %155 = vmatpush.xpose.msra.mxu0 0.0
    %156 = vmatpush.xpose.msra.mxu0 %v139
    %157 = vmatmul.f32.gmra.mxu0 %v136
    %v158 = vpop.f32.mrf.mxu0
    %v159 = vadd.f32 0.0, %v158
    %160 = vdwg.mxu0
    %v162 = vsel %vm108, %v102, 0
    %v165 = vsel %vm108, %v70, 0
    %167 = vmatpush.xpose.msra.mxu0 0.0
    %168 = vmatpush.xpose.msra.mxu0 0.0
    %169 = vmatpush.xpose.msra.mxu0 0.0
    %170 = vmatpush.xpose.msra.mxu0 0.0
    %171 = vmatpush.xpose.msra.mxu0 0.0
    %172 = vmatpush.xpose.msra.mxu0 0.0
    %173 = vmatpush.xpose.msra.mxu0 0.0
    %174 = vmatpush.xpose.msra.mxu0 0.0
    %175 = vmatpush.xpose.msra.mxu0 0.0
    %176 = vmatpush.xpose.msra.mxu0 0.0
    %177 = vmatpush.xpose.msra.mxu0 0.0
    %178 = vmatpush.xpose.msra.mxu0 0.0
    %179 = vmatpush.xpose.msra.mxu0 0.0
    %180 = vmatpush.xpose.msra.mxu0 0.0
    %181 = vmatpush.xpose.msra.mxu0 0.0
    %182 = vmatpush.xpose.msra.mxu0 %v165
    %183 = vmatmul.f32.gmra.mxu0 %v162
    %v184 = vpop.f32.mrf.mxu0
    %v185 = vadd.f32 0.0, %v184
    %186 = vdwg.mxu0
    %v188 = vsel %vm108, %v103, 0
    %v191 = vsel %vm108, %v71, 0
    %193 = vmatpush.xpose.msra.mxu0 0.0
    %194 = vmatpush.xpose.msra.mxu0 0.0
    %195 = vmatpush.xpose.msra.mxu0 0.0
    %196 = vmatpush.xpose.msra.mxu0 0.0
    %197 = vmatpush.xpose.msra.mxu0 0.0
    %198 = vmatpush.xpose.msra.mxu0 0.0
    %199 = vmatpush.xpose.msra.mxu0 0.0
    %200 = vmatpush.xpose.msra.mxu0 0.0
    %201 = vmatpush.xpose.msra.mxu0 0.0
    %202 = vmatpush.xpose.msra.mxu0 0.0
    %203 = vmatpush.xpose.msra.mxu0 0.0
    %204 = vmatpush.xpose.msra.mxu0 0.0
    %205 = vmatpush.xpose.msra.mxu0 0.0
    %206 = vmatpush.xpose.msra.mxu0 0.0
    %207 = vmatpush.xpose.msra.mxu0 0.0
    %208 = vmatpush.xpose.msra.mxu0 %v191
    %209 = vmatmul.f32.gmra.mxu0 %v188
    %v210 = vpop.f32.mrf.mxu0
    %v211 = vadd.f32 0.0, %v210
    %212 = vdwg.mxu0
    %v214 = vsel %vm108, %v104, 0
    %v217 = vsel %vm108, %v72, 0
    %219 = vmatpush.xpose.msra.mxu0 0.0
    %220 = vmatpush.xpose.msra.mxu0 0.0
    %221 = vmatpush.xpose.msra.mxu0 0.0
    %222 = vmatpush.xpose.msra.mxu0 0.0
    %223 = vmatpush.xpose.msra.mxu0 0.0
    %224 = vmatpush.xpose.msra.mxu0 0.0
    %225 = vmatpush.xpose.msra.mxu0 0.0
    %226 = vmatpush.xpose.msra.mxu0 0.0
    %227 = vmatpush.xpose.msra.mxu0 0.0
    %228 = vmatpush.xpose.msra.mxu0 0.0
    %229 = vmatpush.xpose.msra.mxu0 0.0
    %230 = vmatpush.xpose.msra.mxu0 0.0
    %231 = vmatpush.xpose.msra.mxu0 0.0
    %232 = vmatpush.xpose.msra.mxu0 0.0
    %233 = vmatpush.xpose.msra.mxu0 0.0
    %234 = vmatpush.xpose.msra.mxu0 %v217
    %235 = vmatmul.f32.gmra.mxu0 %v214
    %v236 = vpop.f32.mrf.mxu0
    %v237 = vadd.f32 0.0, %v236
    %238 = vdwg.mxu0
    %v240 = vsel %vm108, %v105, 0
    %v243 = vsel %vm108, %v73, 0
    %245 = vmatpush.xpose.msra.mxu0 0.0
    %246 = vmatpush.xpose.msra.mxu0 0.0
    %247 = vmatpush.xpose.msra.mxu0 0.0
    %248 = vmatpush.xpose.msra.mxu0 0.0
    %249 = vmatpush.xpose.msra.mxu0 0.0
    %250 = vmatpush.xpose.msra.mxu0 0.0
    %251 = vmatpush.xpose.msra.mxu0 0.0
    %252 = vmatpush.xpose.msra.mxu0 0.0
    %253 = vmatpush.xpose.msra.mxu0 0.0
    %254 = vmatpush.xpose.msra.mxu0 0.0
    %255 = vmatpush.xpose.msra.mxu0 0.0
    %256 = vmatpush.xpose.msra.mxu0 0.0
    %257 = vmatpush.xpose.msra.mxu0 0.0
    %258 = vmatpush.xpose.msra.mxu0 0.0
    %259 = vmatpush.xpose.msra.mxu0 0.0
    %260 = vmatpush.xpose.msra.mxu0 %v243
    %261 = vmatmul.f32.gmra.mxu0 %v240
    %v262 = vpop.f32.mrf.mxu0
    %v263 = vadd.f32 0.0, %v262
    %264 = vdwg.mxu0
    %v266 = vsel %vm108, %v106, 0
    %v269 = vsel %vm108, %v74, 0
    %271 = vmatpush.xpose.msra.mxu0 0.0
    %272 = vmatpush.xpose.msra.mxu0 0.0
    %273 = vmatpush.xpose.msra.mxu0 0.0
    %274 = vmatpush.xpose.msra.mxu0 0.0
    %275 = vmatpush.xpose.msra.mxu0 0.0
    %276 = vmatpush.xpose.msra.mxu0 0.0
    %277 = vmatpush.xpose.msra.mxu0 0.0
    %278 = vmatpush.xpose.msra.mxu0 0.0
    %279 = vmatpush.xpose.msra.mxu0 0.0
    %280 = vmatpush.xpose.msra.mxu0 0.0
    %281 = vmatpush.xpose.msra.mxu0 0.0
    %282 = vmatpush.xpose.msra.mxu0 0.0
    %283 = vmatpush.xpose.msra.mxu0 0.0
    %284 = vmatpush.xpose.msra.mxu0 0.0
    %285 = vmatpush.xpose.msra.mxu0 0.0
    %286 = vmatpush.xpose.msra.mxu0 %v269
    %287 = vmatmul.f32.gmra.mxu0 %v266
    %v288 = vpop.f32.mrf.mxu0
    %v289 = vadd.f32 0.0, %v288
    %290 = vdwg.mxu0
    %v292 = vsel %vm108, %v107, 0
    %v295 = vsel %vm108, %v75, 0
    %297 = vmatpush.xpose.msra.mxu0 0.0
    %298 = vmatpush.xpose.msra.mxu0 0.0
    %299 = vmatpush.xpose.msra.mxu0 0.0
    %300 = vmatpush.xpose.msra.mxu0 0.0
    %301 = vmatpush.xpose.msra.mxu0 0.0
    %302 = vmatpush.xpose.msra.mxu0 0.0
    %303 = vmatpush.xpose.msra.mxu0 0.0
    %304 = vmatpush.xpose.msra.mxu0 0.0
    %305 = vmatpush.xpose.msra.mxu0 0.0
    %306 = vmatpush.xpose.msra.mxu0 0.0
    %307 = vmatpush.xpose.msra.mxu0 0.0
    %308 = vmatpush.xpose.msra.mxu0 0.0
    %309 = vmatpush.xpose.msra.mxu0 0.0
    %310 = vmatpush.xpose.msra.mxu0 0.0
    %311 = vmatpush.xpose.msra.mxu0 0.0
    %312 = vmatpush.xpose.msra.mxu0 %v295
    %313 = vmatmul.f32.gmra.mxu0 %v292
    %v314 = vpop.f32.mrf.mxu0
    %v315 = vadd.f32 0.0, %v314
    %316 = vdwg.mxu0
    %v325 = vrot.slane %v159, 7
    %vm326 = vcmask 1041409
    %v327 = vsel %vm326, %v325, %v133
    %v328 = vrot.slane %v185, 6
    %vm329 = vcmask 1042434
    %v330 = vsel %vm329, %v328, %v327
    %v331 = vrot.slane %v211, 5
    %vm332 = vcmask 1043459
    %v333 = vsel %vm332, %v331, %v330
    %v334 = vrot.slane %v237, 4
    %vm335 = vcmask 1044484
    %v336 = vsel %vm335, %v334, %v333
    %v337 = vrot.slane %v263, 3
    %vm338 = vcmask 1045509
    %v339 = vsel %vm338, %v337, %v336
    %v340 = vrot.slane %v289, 2
    %vm341 = vcmask 1046534
    %v342 = vsel %vm341, %v340, %v339
    %v343 = vrot.slane %v315, 1
    %vm344 = vcmask 1047559
    %v345 = vsel %vm344, %v343, %v342
    %v347 = vrot.slane %v133, 1
    %v348 = vsel %vm326, %v159, %v347
    %v349 = vrot.slane %v185, 7
    %v350 = vsel %vm329, %v349, %v348
    %v351 = vrot.slane %v211, 6
    %v352 = vsel %vm332, %v351, %v350
    %v353 = vrot.slane %v237, 5
    %v354 = vsel %vm335, %v353, %v352
    %v355 = vrot.slane %v263, 4
    %v356 = vsel %vm338, %v355, %v354
    %v357 = vrot.slane %v289, 3
    %v358 = vsel %vm341, %v357, %v356
    %v359 = vrot.slane %v315, 2
    %v360 = vsel %vm344, %v359, %v358
    %361 = vrot.lane.b32.xlu0 %v360, 8
    %v362 = vpop.permute.xlu0 %361
    %v364 = vrot.slane %v133, 2
    %v365 = vrot.slane %v159, 1
    %v366 = vsel %vm326, %v365, %v364
    %v367 = vsel %vm329, %v185, %v366
    %v368 = vrot.slane %v211, 7
    %v369 = vsel %vm332, %v368, %v367
    %v370 = vrot.slane %v237, 6
    %v371 = vsel %vm335, %v370, %v369
    %v372 = vrot.slane %v263, 5
    %v373 = vsel %vm338, %v372, %v371
    %v374 = vrot.slane %v289, 4
    %v375 = vsel %vm341, %v374, %v373
    %v376 = vrot.slane %v315, 3
    %v377 = vsel %vm344, %v376, %v375
    %378 = vrot.lane.b32.xlu0 %v377, 16
    %v379 = vpop.permute.xlu0 %378
    %v381 = vrot.slane %v133, 3
    %v382 = vrot.slane %v159, 2
    %v383 = vsel %vm326, %v382, %v381
    %v384 = vrot.slane %v185, 1
    %v385 = vsel %vm329, %v384, %v383
    %v386 = vsel %vm332, %v211, %v385
    %v387 = vrot.slane %v237, 7
    %v388 = vsel %vm335, %v387, %v386
    %v389 = vrot.slane %v263, 6
    %v390 = vsel %vm338, %v389, %v388
    %v391 = vrot.slane %v289, 5
    %v392 = vsel %vm341, %v391, %v390
    %v393 = vrot.slane %v315, 4
    %v394 = vsel %vm344, %v393, %v392
    %395 = vrot.lane.b32.xlu0 %v394, 24
    %v396 = vpop.permute.xlu0 %395
    %v398 = vrot.slane %v133, 4
    %v399 = vrot.slane %v159, 3
    %v400 = vsel %vm326, %v399, %v398
    %v401 = vrot.slane %v185, 2
    %v402 = vsel %vm329, %v401, %v400
    %v403 = vrot.slane %v211, 1
    %v404 = vsel %vm332, %v403, %v402
    %v405 = vsel %vm335, %v237, %v404
    %v406 = vrot.slane %v263, 7
    %v407 = vsel %vm338, %v406, %v405
    %v408 = vrot.slane %v289, 6
    %v409 = vsel %vm341, %v408, %v407
    %v410 = vrot.slane %v315, 5
    %v411 = vsel %vm344, %v410, %v409
    %412 = vrot.lane.b32.xlu0 %v411, 32
    %v413 = vpop.permute.xlu0 %412
    %v415 = vrot.slane %v133, 5
    %v416 = vrot.slane %v159, 4
    %v417 = vsel %vm326, %v416, %v415
    %v418 = vrot.slane %v185, 3
    %v419 = vsel %vm329, %v418, %v417
    %v420 = vrot.slane %v211, 2
    %v421 = vsel %vm332, %v420, %v419
    %v422 = vrot.slane %v237, 1
    %v423 = vsel %vm335, %v422, %v421
    %v424 = vsel %vm338, %v263, %v423
    %v425 = vrot.slane %v289, 7
    %v426 = vsel %vm341, %v425, %v424
    %v427 = vrot.slane %v315, 6
    %v428 = vsel %vm344, %v427, %v426
    %429 = vrot.lane.b32.xlu0 %v428, 40
    %v430 = vpop.permute.xlu0 %429
    %v432 = vrot.slane %v133, 6
    %v433 = vrot.slane %v159, 5
    %v434 = vsel %vm326, %v433, %v432
    %v435 = vrot.slane %v185, 4
    %v436 = vsel %vm329, %v435, %v434
    %v437 = vrot.slane %v211, 3
    %v438 = vsel %vm332, %v437, %v436
    %v439 = vrot.slane %v237, 2
    %v440 = vsel %vm335, %v439, %v438
    %v441 = vrot.slane %v263, 1
    %v442 = vsel %vm338, %v441, %v440
    %v443 = vsel %vm341, %v289, %v442
    %v444 = vrot.slane %v315, 7
    %v445 = vsel %vm344, %v444, %v443
    %446 = vrot.lane.b32.xlu0 %v445, 48
    %v447 = vpop.permute.xlu0 %446
    %v449 = vrot.slane %v133, 7
    %v450 = vrot.slane %v159, 6
    %v451 = vsel %vm326, %v450, %v449
    %v452 = vrot.slane %v185, 5
    %v453 = vsel %vm329, %v452, %v451
    %v454 = vrot.slane %v211, 4
    %v455 = vsel %vm332, %v454, %v453
    %v456 = vrot.slane %v237, 3
    %v457 = vsel %vm335, %v456, %v455
    %v458 = vrot.slane %v263, 2
    %v459 = vsel %vm338, %v458, %v457
    %v460 = vrot.slane %v289, 1
    %v461 = vsel %vm341, %v460, %v459
    %v462 = vsel %vm344, %v315, %v461
    %463 = vrot.lane.b32.xlu0 %v462, 56
    %v464 = vpop.permute.xlu0 %463
    %v466 = vsel %vm108, %v345, %v362
    %vm467 = vcmask 130048
    %v468 = vsel %vm467, %v466, %v379
    %vm469 = vcmask 195584
    %v470 = vsel %vm469, %v468, %v396
    %vm471 = vcmask 261120
    %v472 = vsel %vm471, %v470, %v413
    %vm473 = vcmask 326656
    %v474 = vsel %vm473, %v472, %v430
    %vm475 = vcmask 392192
    %v476 = vsel %vm475, %v474, %v447
    %vm477 = vcmask 457728
    %v478 = vsel %vm477, %v476, %v464
    %v479 = vpack.c.bf16 %v478, %v478
    %v480 = vld [vmem:[#allocation7] sm:$0xf]
    %v481 = vld [vmem:[#allocation7 + $0x4] sm:$0xf]
    %v482 = vld [vmem:[#allocation7 + $0x8] sm:$0xf]
    %v483 = vld [vmem:[#allocation7 + $0xc] sm:$0xf]
    %v484 = vld [vmem:[#allocation7 + $0x10] sm:$0xf]
    %v485 = vld [vmem:[#allocation7 + $0x14] sm:$0xf]
    %v486 = vld [vmem:[#allocation7 + $0x18] sm:$0xf]
    %v487 = vld [vmem:[#allocation7 + $0x1c] sm:$0xf]
    %v488 = vld [vmem:[%s3] sm:$0x1]
    %v490 = vperm.slane %v488, 0
    %v500 = vunpack.c.l.b16 %v480
    %v501 = vunpack.c.l.b16 %v481
    %v502 = vunpack.c.l.b16 %v482
    %v503 = vunpack.c.l.b16 %v483
    %v504 = vunpack.c.l.b16 %v484
    %v505 = vunpack.c.l.b16 %v485
    %v506 = vunpack.c.l.b16 %v486
    %v507 = vunpack.c.l.b16 %v487
    %v508 = vpack.c.b16 %v501, %v500
    %v509 = vpack.c.b16 %v503, %v502
    %v510 = vpack.c.b16 %v505, %v504
    %v511 = vpack.c.b16 %v507, %v506
    %vm516 = vcmask 523264
    %v518 = vsel %vm516, %v479, 0
    %520 = vmatpush.bf16.msra.mxu0 0
    %521 = vmatpush.bf16.msra.mxu0 0
    %522 = vmatpush.bf16.msra.mxu0 0
    %523 = vmatpush.bf16.msra.mxu0 0
    %524 = vmatpush.bf16.msra.mxu0 %v511
    %525 = vmatpush.bf16.msra.mxu0 %v510
    %526 = vmatpush.bf16.msra.mxu0 %v509
    %527 = vmatpush.bf16.msra.mxu0 %v508
    %528 = vmatmul.bf16.gmra.mxu0 %v518
    %v529 = vpop.f32.mrf.mxu0
    %v530 = vadd.f32 %v490, %v529
    %v531 = vpop.f32.mrf.mxu0
    %532 = vdwg.mxu0
    %533 = vst [vmem:[#allocation8] sm:$0xff] %v530
    // Predicated region
    $region30: #{tpu_custom_call.1} parent=1 // pred_check
      _
    $region31: #{tpu_custom_call.1} parent=1 // pred_check_branch
      %535 = sbr.rel (0) target = $region33
    $region32: #{tpu_custom_call.1} parent=1 // pred_region
      %537 = vsyncadd [#allocation4], 0
      %s539 = sshll.u32 [#allocation8], 4
      %s540 = int_to_ptr.vmem [resolvable:$true] %s539
      %s541 = sshll.u32 %s4, 4
      %s542 = int_to_ptr.hbm [resolvable:$true] %s541
      %544 = dma.vmem_to_hbm [thread:$0]  %s540, 128, %s542, [#allocation4]
    $region33: #{tpu_custom_call.1} parent=1 // pred_fallthru
      _
    // Predicated region
    $region34: #{tpu_custom_call.1} parent=1 // pred_check
      _
    $region35: #{tpu_custom_call.1} parent=1 // pred_check_branch
      %546 = sbr.rel (0) target = $region37
    $region36: #{tpu_custom_call.1} parent=1 // pred_region
      %548 = dma.done [#allocation4], 128
    $region37: #{tpu_custom_call.1} parent=1 // pred_fallthru
      _
    %549 = vsyncpa [#allocation3], 1
    %550 = vsyncpa [#allocation6], 1
    %551 = vsyncpa [#allocation4], 1

</llo_original>
